<compile_context>
chip_gen: v5e
topology: v5e:2x2
jax: 0.10.0
libtpu: 0.0.40
codegen_flags: <defaults>
</compile_context>

<pallas_src>
import functools
import math

import jax
import jax.numpy as jnp
from jax.experimental import pallas as pl
from jax.experimental.pallas import tpu as pltpu


# Max tile sizes: dst-node tile (lanes) x src-node block (sublanes).
# TM=256 / TS=512 keeps the per-step f32 (TS, TM) temporaries at ~512 KiB and
# the int8 adjacency tile at 128 KiB -- comfortably inside the 32 MiB scoped
# VMEM limit (also safe on v7x's 64 MiB physical VMEM when double-buffered).
TM_MAX = 256
TS_MAX = 512
VMEM_LIMIT = 32 * 1024 * 1024


def _pick_tiles(n):
    """Pick (dst tile, src block). Keep >=2 dst tiles when possible (v7x has 2 TCs)."""
    tm = min(TM_MAX, n)
    while tm > 128 and n // tm < 2:
        tm //= 2
    ts = min(TS_MAX, n)
    assert n % tm == 0 and n % ts == 0, (n, tm, ts)
    return tm, ts


# ---------------- kernel 1: fused projection + attention logits --------------

def project_kernel(x_ref, w_ref, featt_ref, el_ref, ert_ref, *, num_heads, out_feats):
    hfo = num_heads * out_feats
    x = x_ref[...].astype(jnp.bfloat16)
    w = w_ref[...].astype(jnp.bfloat16)
    # Single fused MXU matmul: [feat | el | er]  (ts, hfo + 2H), f32 accumulate.
    res = jnp.dot(x, w, preferred_element_type=jnp.float32)
    featt_ref[0, :, :] = res[:, :hfo].T.astype(featt_ref.dtype)      # (hfo, ts) lane-dense
    el_ref[...] = res[:, hfo:hfo + num_heads]                        # (ts, H)  src logits
    ert_ref[...] = res[:, hfo + num_heads:].T                        # (H, ts)  dst logits, lane-dense


def gat_project(x, w_all, *, num_heads, out_feats, ts):
    n, fin = x.shape
    hfo = num_heads * out_feats
    nj = n // ts
    kernel = functools.partial(project_kernel, num_heads=num_heads, out_feats=out_feats)
    return pl.pallas_call(
        kernel,
        out_shape=(
            jax.ShapeDtypeStruct((nj, hfo, ts), jnp.bfloat16),   # feat^T, blocked by src tile
            jax.ShapeDtypeStruct((n, num_heads), jnp.float32),   # el (src on sublanes)
            jax.ShapeDtypeStruct((num_heads, n), jnp.float32),   # er^T (dst on lanes)
        ),
        grid_spec=pltpu.PrefetchScalarGridSpec(
            num_scalar_prefetch=0,
            grid=(nj,),
            in_specs=[
                pl.BlockSpec((ts, fin), lambda i: (i, 0)),
                pl.BlockSpec((fin, hfo + 2 * num_heads), lambda i: (0, 0)),
            ],
            out_specs=(
                pl.BlockSpec((1, hfo, ts), lambda i: (i, 0, 0)),
                pl.BlockSpec((ts, num_heads), lambda i: (i, 0)),
                pl.BlockSpec((num_heads, ts), lambda i: (0, i)),
            ),
        ),
        compiler_params=pltpu.CompilerParams(
            dimension_semantics=("parallel",),
            vmem_limit_bytes=VMEM_LIMIT,
        ),
        cost_estimate=pl.CostEstimate(
            flops=int(2 * n * fin * (hfo + 2 * num_heads)),
            transcendentals=0,
            bytes_accessed=int(n * fin * 2 + n * hfo * 2 + n * num_heads * 12),
        ),
    )(x, w_all)


# -------------- kernel 2: edge softmax + aggregation (+ fused norm) -----------

def gat_attn_kernel(adj_ref, el_ref, ert_ref, featt_ref, b_ref, g_ref, bt_ref,
                    o_ref, m_sc, l_sc, acc_sc,
                    *, num_heads, out_feats, apply_elu, apply_norm, eps=1e-5):
    fo = out_feats
    j = pl.program_id(1)

    @pl.when(j == 0)
    def _():
        m_sc[...] = jnp.full(m_sc.shape, -1e30, m_sc.dtype)
        l_sc[...] = jnp.zeros(l_sc.shape, l_sc.dtype)
        acc_sc[...] = jnp.zeros(acc_sc.shape, acc_sc.dtype)

    mask = adj_ref[...] > 0                  # (TS, TM): src on sublanes, dst on lanes
    el = el_ref[...]                         # (TS, H)  f32
    ert = ert_ref[...]                       # (H, TM)  f32
    feat_t = featt_ref[j]                    # (hfo, TS) bf16 -- VMEM-resident, dyn 1st-axis idx

    # Per-head online softmax; results written straight into sublane slices of
    # the lane-dense scratch (no lane-axis concatenates, dst nodes on lanes).
    for h in range(num_heads):
        e = el[:, h:h + 1] + ert[h:h + 1, :]                  # (TS, TM)
        e = jnp.where(e > 0, e, 0.2 * e)                      # leaky_relu, slope 0.2
        e = jnp.where(mask, e, -1e30)
        m_old = m_sc[h:h + 1, :]                              # (1, TM)
        m_new = jnp.maximum(m_old, jnp.max(e, axis=0, keepdims=True))
        # Explicitly zero masked lanes (robust even for fully-masked tiles).
        p = jnp.where(mask, jnp.exp(e - m_new), 0.0)          # (TS, TM) unnormalized alpha
        corr = jnp.exp(m_old - m_new)                         # (1, TM)
        l_sc[h:h + 1, :] = corr * l_sc[h:h + 1, :] + jnp.sum(p, axis=0, keepdims=True)
        # out^T_h (Fo, TM) = feat^T_h (Fo, TS) @ p (TS, TM)   -- lane-dense accumulator.
        pv = jnp.dot(feat_t[h * fo:(h + 1) * fo, :], p.astype(jnp.bfloat16),
                     preferred_element_type=jnp.float32)
        acc_sc[h * fo:(h + 1) * fo, :] = corr * acc_sc[h * fo:(h + 1) * fo, :] + pv
        m_sc[h:h + 1, :] = m_new

    @pl.when(j == pl.num_programs(1) - 1)
    def _():
        # Finalize: re-read scratch refs (don't pin hot-loop values across blocks).
        inv = 1.0 / l_sc[...]                                 # (H, TM), exact reciprocal
        for h in range(num_heads):
            acc_sc[h * fo:(h + 1) * fo, :] = acc_sc[h * fo:(h + 1) * fo, :] * inv[h:h + 1, :]
        out = acc_sc[...] + b_ref[...]                        # (hfo, TM) + (hfo, 1)
        if apply_elu:
            out = jnp.where(out > 0, out, jnp.exp(out) - 1.0)
        if apply_norm:
            # LayerNorm over the feature dim (sublane axis in this layout).
            mu = jnp.mean(out, axis=0, keepdims=True)
            var = jnp.mean((out - mu) ** 2, axis=0, keepdims=True)
            out = (out - mu) * jax.lax.rsqrt(var + eps)
            out = out * g_ref[...] + bt_ref[...]
        o_ref[...] = out.astype(o_ref.dtype)                  # single lane-dense store


def gat_attention(adj, feat_t, el, er_t, bias_t, gamma_t, beta_t,
                  *, num_heads, out_feats, apply_elu, apply_norm, tm, ts, out_dtype):
    n = adj.shape[0]
    hfo = num_heads * out_feats
    nj = n // ts
    kernel = functools.partial(gat_attn_kernel, num_heads=num_heads,
                               out_feats=out_feats, apply_elu=apply_elu,
                               apply_norm=apply_norm)
    out_bytes = 2 if out_dtype == jnp.bfloat16 else 4
    return pl.pallas_call(
        kernel,
        out_shape=jax.ShapeDtypeStruct((hfo, n), out_dtype),     # transposed, lane-dense
        grid_spec=pltpu.PrefetchScalarGridSpec(
            num_scalar_prefetch=0,
            grid=(n // tm, nj),
            in_specs=[
                # TODO(synk): for v5e, bit-pack the adjacency (1 bit/edge) to cut the n^2 stream.
                pl.BlockSpec((ts, tm), lambda i, j: (j, i)),          # adj[u, v] int8
                pl.BlockSpec((ts, num_heads), lambda i, j: (j, 0)),   # el (src)
                pl.BlockSpec((num_heads, tm), lambda i, j: (0, i)),   # er^T (dst)
                pl.BlockSpec((nj, hfo, ts), lambda i, j: (0, 0, 0)),  # feat^T, VMEM-resident
                pl.BlockSpec((hfo, 1), lambda i, j: (0, 0)),          # bias^T
                pl.BlockSpec((hfo, 1), lambda i, j: (0, 0)),          # gamma^T
                pl.BlockSpec((hfo, 1), lambda i, j: (0, 0)),          # beta^T
            ],
            out_specs=pl.BlockSpec((hfo, tm), lambda i, j: (0, i)),
            scratch_shapes=[
                pltpu.VMEM((num_heads, tm), jnp.float32),   # running max m  (dst on lanes)
                pltpu.VMEM((num_heads, tm), jnp.float32),   # running denom l
                pltpu.VMEM((hfo, tm), jnp.float32),         # running weighted sum (head-major rows)
            ],
        ),
        compiler_params=pltpu.CompilerParams(
            dimension_semantics=("parallel", "arbitrary"),
            vmem_limit_bytes=VMEM_LIMIT,
        ),
        cost_estimate=pl.CostEstimate(
            flops=int(2 * num_heads * n * n * out_feats),
            transcendentals=int(num_heads * n * n),
            bytes_accessed=int(n * n                       # int8 adjacency stream
                               + n * hfo * 2               # feat^T (resident, read once)
                               + n * hfo * out_bytes       # output
                               + n * num_heads * 12),
        ),
    )(adj, el, er_t, feat_t, bias_t, gamma_t, beta_t)


# ----------------------------- params ----------------------------------------

def init_gatconv_params(key, in_feats, out_feats, num_heads):
    k1, k2, k3 = jax.random.split(key, 3)
    gain = math.sqrt(2.0)  # DGL uses xavier_normal_ with gain=sqrt(2)
    std_w = gain * math.sqrt(2.0 / (in_feats + num_heads * out_feats))
    w = std_w * jax.random.normal(k1, (in_feats, num_heads * out_feats), jnp.float32)
    std_a = gain * math.sqrt(2.0 / (1 + out_feats))
    attn_l = std_a * jax.random.normal(k2, (num_heads, out_feats), jnp.float32)
    attn_r = std_a * jax.random.normal(k3, (num_heads, out_feats), jnp.float32)
    # Fold attention vectors into the projection: el = x @ (W . AL), er = x @ (W . AR).
    w3 = w.reshape(in_feats, num_heads, out_feats)
    wl = jnp.einsum("ihf,hf->ih", w3, attn_l)        # (Fin, H)
    wr = jnp.einsum("ihf,hf->ih", w3, attn_r)        # (Fin, H)
    w_all = jnp.concatenate([w, wl, wr], axis=1)     # (Fin, H*Fo + 2H) -- one fused matmul
    bias_t = jnp.zeros((num_heads * out_feats, 1), jnp.float32)
    return dict(w_all=w_all, bias_t=bias_t)


def init_norm_params(dim):
    # TODO(synk): exact `Norm` class is not defined in the reference snippet;
    # implemented as LayerNorm over the (flattened heads*hidden) feature dim.
    return dict(gamma_t=jnp.ones((dim, 1), jnp.float32),
                beta_t=jnp.zeros((dim, 1), jnp.float32))


# ----------------------------- model ------------------------------------------

def init_gat(key, in_size, hid_size, out_size, heads, num_layers):
    keys = jax.random.split(key, num_layers + 1)
    layers = []
    layers.append(dict(p=init_gatconv_params(keys[0], in_size, hid_size, heads[0]),
                       norm=init_norm_params(hid_size * heads[0]),
                       num_heads=heads[0], out_feats=hid_size,
                       apply_elu=True, apply_norm=True))
    for l in range(num_layers - 1):
        layers.append(dict(p=init_gatconv_params(keys[l + 1], hid_size * heads[l],
                                                 hid_size, heads[l + 1]),
                           norm=init_norm_params(hid_size * heads[l + 1]),
                           num_heads=heads[l + 1], out_feats=hid_size,
                           apply_elu=True, apply_norm=True))
    hfo_last = heads[-1] * out_size
    layers.append(dict(p=init_gatconv_params(keys[num_layers], hid_size * heads[-2],
                                             out_size, heads[-1]),
                       norm=dict(gamma_t=jnp.ones((hfo_last, 1), jnp.float32),
                                 beta_t=jnp.zeros((hfo_last, 1), jnp.float32)),
                       num_heads=heads[-1], out_feats=out_size,
                       apply_elu=False, apply_norm=False))
    return layers


def gat_forward(layers, adj_i8, inputs):
    # inputs: (n, in_size) node features; adj_i8[u, v] = 1 iff edge u -> v.
    h = inputs
    n = inputs.shape[0]
    tm, ts = _pick_tiles(n)
    for idx, layer in enumerate(layers):
        p = layer["p"]
        last = idx == len(layers) - 1
        feat_t, el, er_t = gat_project(h, p["w_all"],
                                       num_heads=layer["num_heads"],
                                       out_feats=layer["out_feats"], ts=ts)
        out_t = gat_attention(adj_i8, feat_t, el, er_t, p["bias_t"],
                              layer["norm"]["gamma_t"], layer["norm"]["beta_t"],
                              num_heads=layer["num_heads"],
                              out_feats=layer["out_feats"],
                              apply_elu=layer["apply_elu"],
                              apply_norm=layer["apply_norm"],
                              tm=tm, ts=ts,
                              out_dtype=jnp.float32 if last else jnp.bfloat16)
        if last:
            # last GATConv: mean over heads (tiny JAX glue on the transposed output)
            h = out_t.reshape(layer["num_heads"], layer["out_feats"], n).mean(axis=0).T
        else:
            h = out_t.T     # back to (n, heads*hid) natural layout for the next projection
    return h


# ----------------------------- main --------------------------------------------

if __name__ == "__main__":
    # Small deterministic config: in=16, hid=8, out=4, heads=[2,2,2], 2 layers,
    # dropout=0.0 (inference => identity), enable_background=False.
    N = 256
    IN_SIZE, HID_SIZE, OUT_SIZE = 16, 8, 4
    HEADS = [2, 2, 2]
    NUM_LAYERS = 2

    root = jax.random.PRNGKey(0)
    k_x, k_adj, k_params = jax.random.split(root, 3)

    x = jax.random.normal(k_x, (N, IN_SIZE), jnp.float32)
    adj = jax.random.uniform(k_adj, (N, N)) < 0.05
    adj = jnp.logical_or(adj, jnp.eye(N, dtype=bool))   # self-loops => no 0 in-degree
    adj_i8 = adj.astype(jnp.int8)                       # adj[u, v] = 1 iff edge u -> v

    layers = init_gat(k_params, IN_SIZE, HID_SIZE, OUT_SIZE, HEADS, NUM_LAYERS)

    out = gat_forward(layers, adj_i8, x)
    out = jax.block_until_ready(out)
    assert out.shape == (N, OUT_SIZE), out.shape
    assert bool(jnp.all(jnp.isfinite(out)))
    print("KERNEL_OK")
</pallas_src>

<mosaic_0001>
module attributes {stable_mosaic.version = 11 : i64} {
  func.func @project_kernel(%arg0: i32, %arg1: memref<256x16xf32, #tpu.memory_space<vmem>>, %arg2: memref<16x20xf32, #tpu.memory_space<vmem>>, %arg3: memref<1x16x256xbf16, #tpu.memory_space<vmem>>, %arg4: memref<256x2xf32, #tpu.memory_space<vmem>>, %arg5: memref<2x256xf32, #tpu.memory_space<vmem>>) attributes {dimension_semantics = [#tpu.dimension_semantics<parallel>], iteration_bounds = array<i64: 1>, scalar_prefetch = 0 : i64, scratch_operands = 0 : i64, tpu.core_type = #tpu.core_type<tc>, window_params = [{transform_indices = @transform_0, window_bounds = array<i64: 256, 16>}, {pipeline_mode = #tpu.pipeline_mode<synchronous>, transform_indices = @transform_1, window_bounds = array<i64: 16, 20>}, {transform_indices = @transform_2, window_bounds = array<i64: 1, 16, 256>}, {transform_indices = @transform_3, window_bounds = array<i64: 256, 2>}, {transform_indices = @transform_4, window_bounds = array<i64: 2, 256>}]} {
    %c0 = arith.constant 0 : index
    %c0_0 = arith.constant 0 : index
    %0 = vector.load %arg1[%c0, %c0_0] : memref<256x16xf32, #tpu.memory_space<vmem>>, vector<256x16xf32>
    %1 = arith.truncf %0 : vector<256x16xf32> to vector<256x16xbf16>
    %c0_1 = arith.constant 0 : index
    %c0_2 = arith.constant 0 : index
    %2 = vector.load %arg2[%c0_1, %c0_2] : memref<16x20xf32, #tpu.memory_space<vmem>>, vector<16x20xf32>
    %3 = arith.truncf %2 : vector<16x20xf32> to vector<16x20xbf16>
    %cst = arith.constant dense<0.000000e+00> : vector<256x20xf32>
    %4 = tpu.matmul %1, %3, %cst {dimension_numbers = #tpu.dot_dimension_numbers<[1], [0], [0], [1], [0, 0, 1, 1], [], []>} : vector<256x16xbf16>, vector<16x20xbf16>, vector<256x20xf32> -> vector<256x20xf32>
    %5 = vector.extract_strided_slice %4 {offsets = [0, 0], sizes = [256, 16], strides = [1, 1]} : vector<256x20xf32> to vector<256x16xf32>
    %6 = tpu.transpose %5, [1, 0] : vector<256x16xf32> -> vector<16x256xf32>
    %7 = arith.truncf %6 : vector<16x256xf32> to vector<16x256xbf16>
    %c0_3 = arith.constant 0 : index
    %c0_4 = arith.constant 0 : index
    %c0_5 = arith.constant 0 : index
    %8 = vector.load %arg3[%c0_3, %c0_4, %c0_5] : memref<1x16x256xbf16, #tpu.memory_space<vmem>>, vector<1x16x256xbf16>
    %9 = vector.shape_cast %8 : vector<1x16x256xbf16> to vector<16x256xbf16>
    %10 = vector.shape_cast %7 : vector<16x256xbf16> to vector<1x16x256xbf16>
    tpu.vector_store %arg3[%c0_3, %c0_4, %c0_5], %10 {strides = array<i32>} : memref<1x16x256xbf16, #tpu.memory_space<vmem>>, vector<1x16x256xbf16>,
    %11 = vector.extract_strided_slice %4 {offsets = [0, 16], sizes = [256, 2], strides = [1, 1]} : vector<256x20xf32> to vector<256x2xf32>
    %c0_6 = arith.constant 0 : index
    %c0_7 = arith.constant 0 : index
    %12 = vector.load %arg4[%c0_6, %c0_7] : memref<256x2xf32, #tpu.memory_space<vmem>>, vector<256x2xf32>
    tpu.vector_store %arg4[%c0_6, %c0_7], %11 {strides = array<i32>} : memref<256x2xf32, #tpu.memory_space<vmem>>, vector<256x2xf32>,
    %13 = vector.extract_strided_slice %4 {offsets = [0, 18], sizes = [256, 2], strides = [1, 1]} : vector<256x20xf32> to vector<256x2xf32>
    %14 = tpu.transpose %13, [1, 0] : vector<256x2xf32> -> vector<2x256xf32>
    %c0_8 = arith.constant 0 : index
    %c0_9 = arith.constant 0 : index
    %15 = vector.load %arg5[%c0_8, %c0_9] : memref<2x256xf32, #tpu.memory_space<vmem>>, vector<2x256xf32>
    tpu.vector_store %arg5[%c0_8, %c0_9], %14 {strides = array<i32>} : memref<2x256xf32, #tpu.memory_space<vmem>>, vector<2x256xf32>,
    return
  }
  func.func @transform_0(%arg0: i32) -> (i32, i32) {
    %c0_i32 = arith.constant 0 : i32
    %c0_i32_0 = arith.constant 0 : i32
    return %arg0, %c0_i32 : i32, i32
  }
  func.func @transform_1(%arg0: i32) -> (i32, i32) {
    %c0_i32 = arith.constant 0 : i32
    %c0_i32_0 = arith.constant 0 : i32
    %c0_i32_1 = arith.constant 0 : i32
    return %c0_i32, %c0_i32_0 : i32, i32
  }
  func.func @transform_2(%arg0: i32) -> (i32, i32, i32) {
    %c0_i32 = arith.constant 0 : i32
    %c0_i32_0 = arith.constant 0 : i32
    %c0_i32_1 = arith.constant 0 : i32
    return %arg0, %c0_i32, %c0_i32_0 : i32, i32, i32
  }
  func.func @transform_3(%arg0: i32) -> (i32, i32) {
    %c0_i32 = arith.constant 0 : i32
    %c0_i32_0 = arith.constant 0 : i32
    return %arg0, %c0_i32 : i32, i32
  }
  func.func @transform_4(%arg0: i32) -> (i32, i32) {
    %c0_i32 = arith.constant 0 : i32
    %c0_i32_0 = arith.constant 0 : i32
    return %c0_i32, %arg0 : i32, i32
  }
}

</mosaic_0001>

<llo_original>
// kernel: tpu_custom_call.1
$region0: #{tpu_custom_call.1}
  #allocation0 [shape = 'u32[]', space=smem, size = 0x4, offset = 0x4, fixed_abs, tag = 'smem constant byte address 0x4 - core index']
  #allocation1 [shape = 'u32[72,128]{1,0:T(1,128)}', space=vmem, size = 0x9000, scoped, tag = 'internal scratch']
  %s0 = inlined_call_operand.vmem [shape: f32[256,16], index: 0, kind: input, shape index: {}]
  %s1 = inlined_call_operand.vmem [shape: f32[16,20], index: 1, kind: input, shape index: {}]
  %s2 = inlined_call_operand.hbm [shape: bf16[1,16,256], index: 2, kind: output, shape index: {0}]
  %s3 = inlined_call_operand.vmem [shape: f32[256,2], index: 3, kind: output, shape index: {1}]
  %s4 = inlined_call_operand.hbm [shape: f32[2,256], index: 4, kind: output, shape index: {2}]
  %5 = xla_tuple %s2, %s3, %s4
  %s6 = sld [smem:[#allocation0]]
  $region34: #{tpu_custom_call.1} parent=0
    _
  %s8 = ssub.s32 1, %s6
  %s9 = scalar_select 0, %s8, %s6
  $region1: #{tpu_custom_call.1} parent=0
    #allocation2 [shape = 'u8[8192]{0}', space=vmem, size = 0x2000, scoped, tag = 'output window, operand 0, single buffered']
    #allocation3 [shape = 's32[1]{0}', space=sflag, size = 0x4, scoped, tag = 'scoped memory for tpu_custom_call.1']
    #allocation4 [shape = 'u8[2048]{0}', space=vmem, size = 0x800, scoped, tag = 'output window, operand 2, single buffered']
    #allocation5 [shape = 's32[1]{0}', space=sflag, size = 0x4, scoped, tag = 'scoped memory for tpu_custom_call.1']
    %10 = vsyncpa [#allocation3], 0
    %11 = vsyncpa [#allocation5], 0
    // Predicated region
    $region2: #{tpu_custom_call.1} parent=1 // pred_check
      _
    $region3: #{tpu_custom_call.1} parent=1 // pred_check_branch
      %13 = sbr.rel (0) target = $region5
    $region4: #{tpu_custom_call.1} parent=1 // pred_region
      _
    $region5: #{tpu_custom_call.1} parent=1 // pred_fallthru
      _
    // Predicated region
    $region6: #{tpu_custom_call.1} parent=1 // pred_check
      _
    $region7: #{tpu_custom_call.1} parent=1 // pred_check_branch
      %15 = sbr.rel (0) target = $region9
    $region8: #{tpu_custom_call.1} parent=1 // pred_region
      _
    $region9: #{tpu_custom_call.1} parent=1 // pred_fallthru
      _
    %v17 = vld [vmem:[%s0] sm:$0xff]
    %v18 = vld [vmem:[%s0 + $0x8] sm:$0xff]
    %v19 = vld [vmem:[%s0 + $0x10] sm:$0xff]
    %v20 = vld [vmem:[%s0 + $0x18] sm:$0xff]
    %v21 = vld [vmem:[%s0 + $0x20] sm:$0xff]
    %v22 = vld [vmem:[%s0 + $0x28] sm:$0xff]
    %v23 = vld [vmem:[%s0 + $0x30] sm:$0xff]
    %v24 = vld [vmem:[%s0 + $0x38] sm:$0xff]
    %v25 = vld [vmem:[%s0 + $0x40] sm:$0xff]
    %v26 = vld [vmem:[%s0 + $0x48] sm:$0xff]
    %v27 = vld [vmem:[%s0 + $0x50] sm:$0xff]
    %v28 = vld [vmem:[%s0 + $0x58] sm:$0xff]
    %v29 = vld [vmem:[%s0 + $0x60] sm:$0xff]
    %v30 = vld [vmem:[%s0 + $0x68] sm:$0xff]
    %v31 = vld [vmem:[%s0 + $0x70] sm:$0xff]
    %v32 = vld [vmem:[%s0 + $0x78] sm:$0xff]
    %v33 = vld [vmem:[%s0 + $0x80] sm:$0xff]
    %v34 = vld [vmem:[%s0 + $0x88] sm:$0xff]
    %v35 = vld [vmem:[%s0 + $0x90] sm:$0xff]
    %v36 = vld [vmem:[%s0 + $0x98] sm:$0xff]
    %v37 = vld [vmem:[%s0 + $0xa0] sm:$0xff]
    %v38 = vld [vmem:[%s0 + $0xa8] sm:$0xff]
    %v39 = vld [vmem:[%s0 + $0xb0] sm:$0xff]
    %v40 = vld [vmem:[%s0 + $0xb8] sm:$0xff]
    %v41 = vld [vmem:[%s0 + $0xc0] sm:$0xff]
    %v42 = vld [vmem:[%s0 + $0xc8] sm:$0xff]
    %v43 = vld [vmem:[%s0 + $0xd0] sm:$0xff]
    %v44 = vld [vmem:[%s0 + $0xd8] sm:$0xff]
    %v45 = vld [vmem:[%s0 + $0xe0] sm:$0xff]
    %v46 = vld [vmem:[%s0 + $0xe8] sm:$0xff]
    %v47 = vld [vmem:[%s0 + $0xf0] sm:$0xff]
    %v48 = vld [vmem:[%s0 + $0xf8] sm:$0xff]
    %v49 = vpack.c.bf16 %v18, %v17
    %v50 = vpack.c.bf16 %v20, %v19
    %v51 = vpack.c.bf16 %v22, %v21
    %v52 = vpack.c.bf16 %v24, %v23
    %v53 = vpack.c.bf16 %v26, %v25
    %v54 = vpack.c.bf16 %v28, %v27
    %v55 = vpack.c.bf16 %v30, %v29
    %v56 = vpack.c.bf16 %v32, %v31
    %v57 = vpack.c.bf16 %v34, %v33
    %v58 = vpack.c.bf16 %v36, %v35
    %v59 = vpack.c.bf16 %v38, %v37
    %v60 = vpack.c.bf16 %v40, %v39
    %v61 = vpack.c.bf16 %v42, %v41
    %v62 = vpack.c.bf16 %v44, %v43
    %v63 = vpack.c.bf16 %v46, %v45
    %v64 = vpack.c.bf16 %v48, %v47
    %v65 = vld [vmem:[%s1] sm:$0xff]
    %v66 = vld [vmem:[%s1 + $0x8] sm:$0xff]
    %v67 = vpack.c.bf16 %v66, %v65
    %vm68 = vcmask 130048
    %v70 = vsel %vm68, %v49, 0
    %v73 = vsel %vm68, %v50, 0
    %v76 = vsel %vm68, %v51, 0
    %v79 = vsel %vm68, %v52, 0
    %v82 = vsel %vm68, %v53, 0
    %v85 = vsel %vm68, %v54, 0
    %v88 = vsel %vm68, %v55, 0
    %v91 = vsel %vm68, %v56, 0
    %v94 = vsel %vm68, %v57, 0
    %v97 = vsel %vm68, %v58, 0
    %v100 = vsel %vm68, %v59, 0
    %v103 = vsel %vm68, %v60, 0
    %v106 = vsel %vm68, %v61, 0
    %v109 = vsel %vm68, %v62, 0
    %v112 = vsel %vm68, %v63, 0
    %v115 = vsel %vm68, %v64, 0
    %117 = vmatpush.bf16.msra.mxu0 0
    %118 = vmatpush.bf16.msra.mxu0 0
    %119 = vmatpush.bf16.msra.mxu0 0
    %120 = vmatpush.bf16.msra.mxu0 0
    %121 = vmatpush.bf16.msra.mxu0 0
    %122 = vmatpush.bf16.msra.mxu0 0
    %123 = vmatpush.bf16.msra.mxu0 0
    %124 = vmatpush.bf16.msra.mxu0 %v67
    %125 = vmatmul.bf16.gmra.mxu0 %v70
    %v126 = vpop.f32.mrf.mxu0
    %v127 = vadd.f32 0.0, %v126
    %v128 = vpop.f32.mrf.mxu0
    %v129 = vadd.f32 0.0, %v128
    %130 = vmatmul.bf16.gmra.mxu0 %v73
    %v131 = vpop.f32.mrf.mxu0
    %v132 = vadd.f32 0.0, %v131
    %v133 = vpop.f32.mrf.mxu0
    %v134 = vadd.f32 0.0, %v133
    %135 = vmatmul.bf16.gmra.mxu0 %v76
    %v136 = vpop.f32.mrf.mxu0
    %v137 = vadd.f32 0.0, %v136
    %v138 = vpop.f32.mrf.mxu0
    %v139 = vadd.f32 0.0, %v138
    %140 = vmatmul.bf16.gmra.mxu0 %v79
    %v141 = vpop.f32.mrf.mxu0
    %v142 = vadd.f32 0.0, %v141
    %v143 = vpop.f32.mrf.mxu0
    %v144 = vadd.f32 0.0, %v143
    %145 = vmatmul.bf16.gmra.mxu0 %v82
    %v146 = vpop.f32.mrf.mxu0
    %v147 = vadd.f32 0.0, %v146
    %v148 = vpop.f32.mrf.mxu0
    %v149 = vadd.f32 0.0, %v148
    %150 = vmatmul.bf16.gmra.mxu0 %v85
    %v151 = vpop.f32.mrf.mxu0
    %v152 = vadd.f32 0.0, %v151
    %v153 = vpop.f32.mrf.mxu0
    %v154 = vadd.f32 0.0, %v153
    %155 = vmatmul.bf16.gmra.mxu0 %v88
    %v156 = vpop.f32.mrf.mxu0
    %v157 = vadd.f32 0.0, %v156
    %v158 = vpop.f32.mrf.mxu0
    %v159 = vadd.f32 0.0, %v158
    %160 = vmatmul.bf16.gmra.mxu0 %v91
    %v161 = vpop.f32.mrf.mxu0
    %v162 = vadd.f32 0.0, %v161
    %v163 = vpop.f32.mrf.mxu0
    %v164 = vadd.f32 0.0, %v163
    %165 = vmatmul.bf16.gmra.mxu0 %v94
    %v166 = vpop.f32.mrf.mxu0
    %v167 = vadd.f32 0.0, %v166
    %v168 = vpop.f32.mrf.mxu0
    %v169 = vadd.f32 0.0, %v168
    %170 = vmatmul.bf16.gmra.mxu0 %v97
    %v171 = vpop.f32.mrf.mxu0
    %v172 = vadd.f32 0.0, %v171
    %v173 = vpop.f32.mrf.mxu0
    %v174 = vadd.f32 0.0, %v173
    %175 = vmatmul.bf16.gmra.mxu0 %v100
    %v176 = vpop.f32.mrf.mxu0
    %v177 = vadd.f32 0.0, %v176
    %v178 = vpop.f32.mrf.mxu0
    %v179 = vadd.f32 0.0, %v178
    %180 = vmatmul.bf16.gmra.mxu0 %v103
    %v181 = vpop.f32.mrf.mxu0
    %v182 = vadd.f32 0.0, %v181
    %v183 = vpop.f32.mrf.mxu0
    %v184 = vadd.f32 0.0, %v183
    %185 = vmatmul.bf16.gmra.mxu0 %v106
    %v186 = vpop.f32.mrf.mxu0
    %v187 = vadd.f32 0.0, %v186
    %v188 = vpop.f32.mrf.mxu0
    %v189 = vadd.f32 0.0, %v188
    %190 = vmatmul.bf16.gmra.mxu0 %v109
    %v191 = vpop.f32.mrf.mxu0
    %v192 = vadd.f32 0.0, %v191
    %v193 = vpop.f32.mrf.mxu0
    %v194 = vadd.f32 0.0, %v193
    %195 = vmatmul.bf16.gmra.mxu0 %v112
    %v196 = vpop.f32.mrf.mxu0
    %v197 = vadd.f32 0.0, %v196
    %v198 = vpop.f32.mrf.mxu0
    %v199 = vadd.f32 0.0, %v198
    %200 = vmatmul.bf16.gmra.mxu0 %v115
    %v201 = vpop.f32.mrf.mxu0
    %v202 = vadd.f32 0.0, %v201
    %v203 = vpop.f32.mrf.mxu0
    %v204 = vadd.f32 0.0, %v203
    %205 = vdwg.mxu0
    %206 = vxpose.xlu0.b32.start [1/16] %v127, 128
    %207 = vxpose.xlu0.b32.cont [2/16] %v129, 128
    %208 = vxpose.xlu0.b32.cont [3/16] %v132, 128
    %209 = vxpose.xlu0.b32.cont [4/16] %v134, 128
    %210 = vxpose.xlu0.b32.cont [5/16] %v137, 128
    %211 = vxpose.xlu0.b32.cont [6/16] %v139, 128
    %212 = vxpose.xlu0.b32.cont [7/16] %v142, 128
    %213 = vxpose.xlu0.b32.cont [8/16] %v144, 128
    %214 = vxpose.xlu0.b32.cont [9/16] %v147, 128
    %215 = vxpose.xlu0.b32.cont [10/16] %v149, 128
    %216 = vxpose.xlu0.b32.cont [11/16] %v152, 128
    %217 = vxpose.xlu0.b32.cont [12/16] %v154, 128
    %218 = vxpose.xlu0.b32.cont [13/16] %v157, 128
    %219 = vxpose.xlu0.b32.cont [14/16] %v159, 128
    %220 = vxpose.xlu0.b32.cont [15/16] %v162, 128
    %221 = vxpose.xlu0.b32.end [16/16] %v164, 128
    %v222 = vpop.trf.xlu0
    %v223 = vpop.trf.xlu0
    %v224 = vpop.trf.xlu0
    %v225 = vpop.trf.xlu0
    %v226 = vpop.trf.xlu0
    %v227 = vpop.trf.xlu0
    %v228 = vpop.trf.xlu0
    %v229 = vpop.trf.xlu0
    %v230 = vpop.trf.xlu0
    %v231 = vpop.trf.xlu0
    %v232 = vpop.trf.xlu0
    %v233 = vpop.trf.xlu0
    %v234 = vpop.trf.xlu0
    %v235 = vpop.trf.xlu0
    %v236 = vpop.trf.xlu0
    %v237 = vpop.trf.xlu0
    %238 = vxpose.xlu0.b32.start [1/16] %v167, 128
    %239 = vxpose.xlu0.b32.cont [2/16] %v169, 128
    %240 = vxpose.xlu0.b32.cont [3/16] %v172, 128
    %241 = vxpose.xlu0.b32.cont [4/16] %v174, 128
    %242 = vxpose.xlu0.b32.cont [5/16] %v177, 128
    %243 = vxpose.xlu0.b32.cont [6/16] %v179, 128
    %244 = vxpose.xlu0.b32.cont [7/16] %v182, 128
    %245 = vxpose.xlu0.b32.cont [8/16] %v184, 128
    %246 = vxpose.xlu0.b32.cont [9/16] %v187, 128
    %247 = vxpose.xlu0.b32.cont [10/16] %v189, 128
    %248 = vxpose.xlu0.b32.cont [11/16] %v192, 128
    %249 = vxpose.xlu0.b32.cont [12/16] %v194, 128
    %250 = vxpose.xlu0.b32.cont [13/16] %v197, 128
    %251 = vxpose.xlu0.b32.cont [14/16] %v199, 128
    %252 = vxpose.xlu0.b32.cont [15/16] %v202, 128
    %253 = vxpose.xlu0.b32.end [16/16] %v204, 128
    %v254 = vpop.trf.xlu0
    %v255 = vpop.trf.xlu0
    %v256 = vpop.trf.xlu0
    %v257 = vpop.trf.xlu0
    %v258 = vpop.trf.xlu0
    %v259 = vpop.trf.xlu0
    %v260 = vpop.trf.xlu0
    %v261 = vpop.trf.xlu0
    %v262 = vpop.trf.xlu0
    %v263 = vpop.trf.xlu0
    %v264 = vpop.trf.xlu0
    %v265 = vpop.trf.xlu0
    %v266 = vpop.trf.xlu0
    %v267 = vpop.trf.xlu0
    %v268 = vpop.trf.xlu0
    %v269 = vpop.trf.xlu0
    %v270 = vpack.c.bf16 %v254, %v222
    %v271 = vpack.c.bf16 %v255, %v223
    %272 = vst [vmem:[#allocation2] sm:$0xff] %v270
    %273 = vst [vmem:[#allocation2 + $0x8] sm:$0xff] %v271
    %306 = vrot.lane.b32.xlu0 %v127, 112
    %v307 = vpop.permute.xlu0 %306
    %308 = vrot.lane.b32.xlu0 %v129, 112
    %v309 = vpop.permute.xlu0 %308
    %310 = vrot.lane.b32.xlu0 %v132, 112
    %v311 = vpop.permute.xlu0 %310
    %312 = vrot.lane.b32.xlu0 %v134, 112
    %v313 = vpop.permute.xlu0 %312
    %314 = vrot.lane.b32.xlu0 %v137, 112
    %v315 = vpop.permute.xlu0 %314
    %316 = vrot.lane.b32.xlu0 %v139, 112
    %v317 = vpop.permute.xlu0 %316
    %318 = vrot.lane.b32.xlu0 %v142, 112
    %v319 = vpop.permute.xlu0 %318
    %320 = vrot.lane.b32.xlu0 %v144, 112
    %v321 = vpop.permute.xlu0 %320
    %322 = vrot.lane.b32.xlu0 %v147, 112
    %v323 = vpop.permute.xlu0 %322
    %324 = vrot.lane.b32.xlu0 %v149, 112
    %v325 = vpop.permute.xlu0 %324
    %326 = vrot.lane.b32.xlu0 %v152, 112
    %v327 = vpop.permute.xlu0 %326
    %328 = vrot.lane.b32.xlu0 %v154, 112
    %v329 = vpop.permute.xlu0 %328
    %330 = vrot.lane.b32.xlu0 %v157, 112
    %v331 = vpop.permute.xlu0 %330
    %332 = vrot.lane.b32.xlu0 %v159, 112
    %v333 = vpop.permute.xlu0 %332
    %334 = vrot.lane.b32.xlu0 %v162, 112
    %v335 = vpop.permute.xlu0 %334
    %336 = vrot.lane.b32.xlu0 %v164, 112
    %v337 = vpop.permute.xlu0 %336
    %338 = vrot.lane.b32.xlu0 %v167, 112
    %v339 = vpop.permute.xlu0 %338
    %340 = vrot.lane.b32.xlu0 %v169, 112
    %v341 = vpop.permute.xlu0 %340
    %342 = vrot.lane.b32.xlu0 %v172, 112
    %v343 = vpop.permute.xlu0 %342
    %344 = vrot.lane.b32.xlu0 %v174, 112
    %v345 = vpop.permute.xlu0 %344
    %346 = vrot.lane.b32.xlu0 %v177, 112
    %v347 = vpop.permute.xlu0 %346
    %348 = vrot.lane.b32.xlu0 %v179, 112
    %v349 = vpop.permute.xlu0 %348
    %350 = vrot.lane.b32.xlu0 %v182, 112
    %v351 = vpop.permute.xlu0 %350
    %352 = vrot.lane.b32.xlu0 %v184, 112
    %v353 = vpop.permute.xlu0 %352
    %354 = vrot.lane.b32.xlu0 %v187, 112
    %v355 = vpop.permute.xlu0 %354
    %356 = vrot.lane.b32.xlu0 %v189, 112
    %v357 = vpop.permute.xlu0 %356
    %358 = vrot.lane.b32.xlu0 %v192, 112
    %v359 = vpop.permute.xlu0 %358
    %360 = vrot.lane.b32.xlu0 %v194, 112
    %v361 = vpop.permute.xlu0 %360
    %362 = vrot.lane.b32.xlu0 %v197, 112
    %v363 = vpop.permute.xlu0 %362
    %364 = vrot.lane.b32.xlu0 %v199, 112
    %v365 = vpop.permute.xlu0 %364
    %366 = vrot.lane.b32.xlu0 %v202, 112
    %v367 = vpop.permute.xlu0 %366
    %368 = vrot.lane.b32.xlu0 %v204, 112
    %v369 = vpop.permute.xlu0 %368
    %vm402 = vcmask 15360
    %403 = vst.msk [vmem:[%s3] sm:$0xff] %vm402, %v307
    %404 = vst.msk [vmem:[%s3 + $0x8] sm:$0xff] %vm402, %v309
    %405 = vst.msk [vmem:[%s3 + $0x10] sm:$0xff] %vm402, %v311
    %406 = vst.msk [vmem:[%s3 + $0x18] sm:$0xff] %vm402, %v313
    %407 = vst.msk [vmem:[%s3 + $0x20] sm:$0xff] %vm402, %v315
    %408 = vst.msk [vmem:[%s3 + $0x28] sm:$0xff] %vm402, %v317
    %409 = vst.msk [vmem:[%s3 + $0x30] sm:$0xff] %vm402, %v319
    %410 = vst.msk [vmem:[%s3 + $0x38] sm:$0xff] %vm402, %v321
    %411 = vst.msk [vmem:[%s3 + $0x40] sm:$0xff] %vm402, %v323
    %412 = vst.msk [vmem:[%s3 + $0x48] sm:$0xff] %vm402, %v325
    %413 = vst.msk [vmem:[%s3 + $0x50] sm:$0xff] %vm402, %v327
    %414 = vst.msk [vmem:[%s3 + $0x58] sm:$0xff] %vm402, %v329
    %415 = vst.msk [vmem:[%s3 + $0x60] sm:$0xff] %vm402, %v331
    %416 = vst.msk [vmem:[%s3 + $0x68] sm:$0xff] %vm402, %v333
    %417 = vst.msk [vmem:[%s3 + $0x70] sm:$0xff] %vm402, %v335
    %418 = vst.msk [vmem:[%s3 + $0x78] sm:$0xff] %vm402, %v337
    %419 = vst.msk [vmem:[%s3 + $0x80] sm:$0xff] %vm402, %v339
    %420 = vst.msk [vmem:[%s3 + $0x88] sm:$0xff] %vm402, %v341
    %421 = vst.msk [vmem:[%s3 + $0x90] sm:$0xff] %vm402, %v343
    %422 = vst.msk [vmem:[%s3 + $0x98] sm:$0xff] %vm402, %v345
    %423 = vst.msk [vmem:[%s3 + $0xa0] sm:$0xff] %vm402, %v347
    %424 = vst.msk [vmem:[%s3 + $0xa8] sm:$0xff] %vm402, %v349
    %425 = vst.msk [vmem:[%s3 + $0xb0] sm:$0xff] %vm402, %v351
    %426 = vst.msk [vmem:[%s3 + $0xb8] sm:$0xff] %vm402, %v353
    %427 = vst.msk [vmem:[%s3 + $0xc0] sm:$0xff] %vm402, %v355
    %428 = vst.msk [vmem:[%s3 + $0xc8] sm:$0xff] %vm402, %v357
    %429 = vst.msk [vmem:[%s3 + $0xd0] sm:$0xff] %vm402, %v359
    %430 = vst.msk [vmem:[%s3 + $0xd8] sm:$0xff] %vm402, %v361
    %431 = vst.msk [vmem:[%s3 + $0xe0] sm:$0xff] %vm402, %v363
    %432 = vst.msk [vmem:[%s3 + $0xe8] sm:$0xff] %vm402, %v365
    %433 = vst.msk [vmem:[%s3 + $0xf0] sm:$0xff] %vm402, %v367
    %434 = vst.msk [vmem:[%s3 + $0xf8] sm:$0xff] %vm402, %v369
    %435 = vrot.lane.b32.xlu0 %v127, 110
    %v436 = vpop.permute.xlu0 %435
    %437 = vrot.lane.b32.xlu0 %v129, 110
    %v438 = vpop.permute.xlu0 %437
    %439 = vrot.lane.b32.xlu0 %v132, 110
    %v440 = vpop.permute.xlu0 %439
    %441 = vrot.lane.b32.xlu0 %v134, 110
    %v442 = vpop.permute.xlu0 %441
    %443 = vrot.lane.b32.xlu0 %v137, 110
    %v444 = vpop.permute.xlu0 %443
    %445 = vrot.lane.b32.xlu0 %v139, 110
    %v446 = vpop.permute.xlu0 %445
    %447 = vrot.lane.b32.xlu0 %v142, 110
    %v448 = vpop.permute.xlu0 %447
    %449 = vrot.lane.b32.xlu0 %v144, 110
    %v450 = vpop.permute.xlu0 %449
    %451 = vrot.lane.b32.xlu0 %v147, 110
    %v452 = vpop.permute.xlu0 %451
    %453 = vrot.lane.b32.xlu0 %v149, 110
    %v454 = vpop.permute.xlu0 %453
    %455 = vrot.lane.b32.xlu0 %v152, 110
    %v456 = vpop.permute.xlu0 %455
    %457 = vrot.lane.b32.xlu0 %v154, 110
    %v458 = vpop.permute.xlu0 %457
    %459 = vrot.lane.b32.xlu0 %v157, 110
    %v460 = vpop.permute.xlu0 %459
    %461 = vrot.lane.b32.xlu0 %v159, 110
    %v462 = vpop.permute.xlu0 %461
    %463 = vrot.lane.b32.xlu0 %v162, 110
    %v464 = vpop.permute.xlu0 %463
    %465 = vrot.lane.b32.xlu0 %v164, 110
    %v466 = vpop.permute.xlu0 %465
    %467 = vrot.lane.b32.xlu0 %v167, 110
    %v468 = vpop.permute.xlu0 %467
    %469 = vrot.lane.b32.xlu0 %v169, 110
    %v470 = vpop.permute.xlu0 %469
    %471 = vrot.lane.b32.xlu0 %v172, 110
    %v472 = vpop.permute.xlu0 %471
    %473 = vrot.lane.b32.xlu0 %v174, 110
    %v474 = vpop.permute.xlu0 %473
    %475 = vrot.lane.b32.xlu0 %v177, 110
    %v476 = vpop.permute.xlu0 %475
    %477 = vrot.lane.b32.xlu0 %v179, 110
    %v478 = vpop.permute.xlu0 %477
    %479 = vrot.lane.b32.xlu0 %v182, 110
    %v480 = vpop.permute.xlu0 %479
    %481 = vrot.lane.b32.xlu0 %v184, 110
    %v482 = vpop.permute.xlu0 %481
    %483 = vrot.lane.b32.xlu0 %v187, 110
    %v484 = vpop.permute.xlu0 %483
    %485 = vrot.lane.b32.xlu0 %v189, 110
    %v486 = vpop.permute.xlu0 %485
    %487 = vrot.lane.b32.xlu0 %v192, 110
    %v488 = vpop.permute.xlu0 %487
    %489 = vrot.lane.b32.xlu0 %v194, 110
    %v490 = vpop.permute.xlu0 %489
    %491 = vrot.lane.b32.xlu0 %v197, 110
    %v492 = vpop.permute.xlu0 %491
    %493 = vrot.lane.b32.xlu0 %v199, 110
    %v494 = vpop.permute.xlu0 %493
    %495 = vrot.lane.b32.xlu0 %v202, 110
    %v496 = vpop.permute.xlu0 %495
    %497 = vrot.lane.b32.xlu0 %v204, 110
    %v498 = vpop.permute.xlu0 %497
    %531 = vxpose.xlu0.b32.start [1/16] %v436, 128
    %532 = vxpose.xlu0.b32.cont [2/16] %v438, 128
    %533 = vxpose.xlu0.b32.cont [3/16] %v440, 128
    %534 = vxpose.xlu0.b32.cont [4/16] %v442, 128
    %535 = vxpose.xlu0.b32.cont [5/16] %v444, 128
    %536 = vxpose.xlu0.b32.cont [6/16] %v446, 128
    %537 = vxpose.xlu0.b32.cont [7/16] %v448, 128
    %538 = vxpose.xlu0.b32.cont [8/16] %v450, 128
    %539 = vxpose.xlu0.b32.cont [9/16] %v452, 128
    %540 = vxpose.xlu0.b32.cont [10/16] %v454, 128
    %541 = vxpose.xlu0.b32.cont [11/16] %v456, 128
    %542 = vxpose.xlu0.b32.cont [12/16] %v458, 128
    %543 = vxpose.xlu0.b32.cont [13/16] %v460, 128
    %544 = vxpose.xlu0.b32.cont [14/16] %v462, 128
    %545 = vxpose.xlu0.b32.cont [15/16] %v464, 128
    %546 = vxpose.xlu0.b32.end [16/16] %v466, 128
    %v547 = vpop.trf.xlu0
    %v548 = vpop.trf.xlu0
    %v549 = vpop.trf.xlu0
    %v550 = vpop.trf.xlu0
    %v551 = vpop.trf.xlu0
    %v552 = vpop.trf.xlu0
    %v553 = vpop.trf.xlu0
    %v554 = vpop.trf.xlu0
    %v555 = vpop.trf.xlu0
    %v556 = vpop.trf.xlu0
    %v557 = vpop.trf.xlu0
    %v558 = vpop.trf.xlu0
    %v559 = vpop.trf.xlu0
    %v560 = vpop.trf.xlu0
    %v561 = vpop.trf.xlu0
    %v562 = vpop.trf.xlu0
    %563 = vxpose.xlu0.b32.start [1/16] %v468, 128
    %564 = vxpose.xlu0.b32.cont [2/16] %v470, 128
    %565 = vxpose.xlu0.b32.cont [3/16] %v472, 128
    %566 = vxpose.xlu0.b32.cont [4/16] %v474, 128
    %567 = vxpose.xlu0.b32.cont [5/16] %v476, 128
    %568 = vxpose.xlu0.b32.cont [6/16] %v478, 128
    %569 = vxpose.xlu0.b32.cont [7/16] %v480, 128
    %570 = vxpose.xlu0.b32.cont [8/16] %v482, 128
    %571 = vxpose.xlu0.b32.cont [9/16] %v484, 128
    %572 = vxpose.xlu0.b32.cont [10/16] %v486, 128
    %573 = vxpose.xlu0.b32.cont [11/16] %v488, 128
    %574 = vxpose.xlu0.b32.cont [12/16] %v490, 128
    %575 = vxpose.xlu0.b32.cont [13/16] %v492, 128
    %576 = vxpose.xlu0.b32.cont [14/16] %v494, 128
    %577 = vxpose.xlu0.b32.cont [15/16] %v496, 128
    %578 = vxpose.xlu0.b32.end [16/16] %v498, 128
    %v579 = vpop.trf.xlu0
    %v580 = vpop.trf.xlu0
    %v581 = vpop.trf.xlu0
    %v582 = vpop.trf.xlu0
    %v583 = vpop.trf.xlu0
    %v584 = vpop.trf.xlu0
    %v585 = vpop.trf.xlu0
    %v586 = vpop.trf.xlu0
    %v587 = vpop.trf.xlu0
    %v588 = vpop.trf.xlu0
    %v589 = vpop.trf.xlu0
    %v590 = vpop.trf.xlu0
    %v591 = vpop.trf.xlu0
    %v592 = vpop.trf.xlu0
    %v593 = vpop.trf.xlu0
    %v594 = vpop.trf.xlu0
    %v597 = vrot.slane %v579, 6
    %vm598 = vcmask 1041408
    %v599 = vsel %vm598, %v547, %v597
    %601 = vst [vmem:[#allocation4] sm:$0xf] %v599
    // Predicated region
    $region10: #{tpu_custom_call.1} parent=1 // pred_check
      _
    $region11: #{tpu_custom_call.1} parent=1 // pred_check_branch
      %603 = sbr.rel (0) target = $region13
    $region12: #{tpu_custom_call.1} parent=1 // pred_region
      %605 = vsyncadd [#allocation3], 0
      %s606 = sshll.u32 [#allocation2], 4
      %s607 = int_to_ptr.vmem [resolvable:$true] %s606
      %s608 = sshll.u32 %s2, 4
      %s609 = int_to_ptr.hbm [resolvable:$true] %s608
      %614 = dma.vmem_to_hbm [thread:$0]  %s607, 256, %s609, [#allocation3], 128, 128, 8
    $region13: #{tpu_custom_call.1} parent=1 // pred_fallthru
      _
    // Predicated region
    $region14: #{tpu_custom_call.1} parent=1 // pred_check
      _
    $region15: #{tpu_custom_call.1} parent=1 // pred_check_branch
      %616 = sbr.rel (0) target = $region17
    $region16: #{tpu_custom_call.1} parent=1 // pred_region
      _
    $region17: #{tpu_custom_call.1} parent=1 // pred_fallthru
      _
    // Predicated region
    $region18: #{tpu_custom_call.1} parent=1 // pred_check
      _
    $region19: #{tpu_custom_call.1} parent=1 // pred_check_branch
      %618 = sbr.rel (0) target = $region21
    $region20: #{tpu_custom_call.1} parent=1 // pred_region
      %620 = vsyncadd [#allocation5], 0
      %s622 = sshll.u32 [#allocation4], 4
      %s623 = int_to_ptr.vmem [resolvable:$true] %s622
      %s624 = sshll.u32 %s4, 4
      %s625 = int_to_ptr.hbm [resolvable:$true] %s624
      %627 = dma.vmem_to_hbm [thread:$0]  %s623, 64, %s625, [#allocation5]
    $region21: #{tpu_custom_call.1} parent=1 // pred_fallthru
      _
    // Predicated region
    $region22: #{tpu_custom_call.1} parent=1 // pred_check
      _
    $region23: #{tpu_custom_call.1} parent=1 // pred_check_branch
      %629 = sbr.rel (0) target = $region25
    $region24: #{tpu_custom_call.1} parent=1 // pred_region
      %631 = dma.done [#allocation3], 256
    $region25: #{tpu_custom_call.1} parent=1 // pred_fallthru
      _
    // Predicated region
    $region26: #{tpu_custom_call.1} parent=1 // pred_check
      _
    $region27: #{tpu_custom_call.1} parent=1 // pred_check_branch
      %633 = sbr.rel (0) target = $region29
    $region28: #{tpu_custom_call.1} parent=1 // pred_region
      _
    $region29: #{tpu_custom_call.1} parent=1 // pred_fallthru
      _
    // Predicated region
    $region30: #{tpu_custom_call.1} parent=1 // pred_check
      _
    $region31: #{tpu_custom_call.1} parent=1 // pred_check_branch
      %635 = sbr.rel (0) target = $region33
    $region32: #{tpu_custom_call.1} parent=1 // pred_region
      %637 = dma.done [#allocation5], 64
    $region33: #{tpu_custom_call.1} parent=1 // pred_fallthru
      _
    %638 = vsyncpa [#allocation3], 1
    %639 = vsyncpa [#allocation5], 1

</llo_original>
